<compile_context>
chip_gen: v6e
topology: v6e:2x2x1
jax: 0.10.0
libtpu: 0.0.40
codegen_flags: <defaults>
</compile_context>

<pallas_src>
import functools

import jax
import jax.numpy as jnp
from jax.experimental import pallas as pl
from jax.experimental.pallas import tpu as pltpu

LANE = 128  # TPU vreg lane width


def _round_up(x, m):
    return ((x + m - 1) // m) * m


def _pad2(a, rows, cols):
    return jnp.pad(a, ((0, rows - a.shape[0]), (0, cols - a.shape[1])))


# --------------------------------------------------------------------------
# Kernel
# --------------------------------------------------------------------------
def _mlp_kernel(x_ref,
                w1_ref, b1_ref,
                w2_ref, b2_ref,
                w3_ref, b3_ref,
                w4_ref, b4_ref,
                o_ref):
    """4x (MXU matmul + f32 bias [+ ReLU]). BN folded, dropout elided."""

    def layer(h, w_ref, b_ref, relu):
        acc = jnp.dot(h, w_ref[...], preferred_element_type=jnp.float32)
        acc = acc + b_ref[...]              # bias (+ folded BN shift), f32
        if relu:
            acc = jnp.maximum(acc, 0.0)
        return acc

    # x arrives from HBM as narrow f32; cast to the MXU operand dtype
    # in-register (no extra host-side HBM pass for the conversion).
    h = x_ref[...].astype(w1_ref.dtype)
    h = layer(h, w1_ref, b1_ref, True).astype(w2_ref.dtype)
    h = layer(h, w2_ref, b2_ref, True).astype(w3_ref.dtype)
    h = layer(h, w3_ref, b3_ref, True).astype(w4_ref.dtype)
    o_ref[...] = layer(h, w4_ref, b4_ref, False).astype(o_ref.dtype)


# --------------------------------------------------------------------------
# One-time parameter preparation (hoisted off the per-call path)
# --------------------------------------------------------------------------
def prepare_params(params, *, mxu_dtype=jnp.bfloat16):
    """Fold inference BatchNorm into the linears, pad hidden dims to 128 lanes,
    cast weights to the MXU operand dtype.  Call ONCE per parameter set."""
    folded = []
    for i in range(1, 5):
        w = params[f"w{i}"]
        b = params[f"b{i}"]
        if f"s{i}" in params:
            s = params[f"s{i}"]           # (1, d_out) BN scale
            t = params[f"t{i}"]           # (1, d_out) BN shift
            w = w * s
            b = b * s + t
        folded.append((w, b))

    d_in = folded[0][0].shape[0]
    out_dim = folded[3][0].shape[1]
    h1, h2, h3 = (folded[k][0].shape[1] for k in range(3))
    # Only hidden dims are lane-padded; input/output dims stay narrow.
    pdims = (d_in,
             _round_up(h1, LANE),
             _round_up(h2, LANE),
             _round_up(h3, LANE),
             out_dim)

    flat = []
    for k, (w, b) in enumerate(folded):
        wp = _pad2(w, pdims[k], pdims[k + 1]).astype(mxu_dtype)
        bp = _pad2(b, 1, pdims[k + 1]).astype(jnp.float32)
        flat.extend((wp, bp))
    return tuple(flat), pdims


# --------------------------------------------------------------------------
# Forward
# --------------------------------------------------------------------------
def _pick_tb(B, *, tb_max=2048, min_steps=4):
    """Largest multiple-of-8 batch tile <= tb_max that still leaves at least
    `min_steps` grid steps (keeps both v7x TensorCores fed on the parallel
    axis) while amortizing per-grid-step pipeline overhead."""
    b8 = _round_up(max(B, 8), 8)
    tb = _round_up(pl.cdiv(b8, min_steps), 8)
    return max(8, min(tb_max, tb, b8))


def multiclass_classifier_v2(x, prepared, *, pdims, tb_max=2048):
    """x: [B, d_in] float32.  prepared/pdims: output of prepare_params."""
    B, d_in = x.shape
    assert d_in == pdims[0], "input dim mismatch with prepared params"
    out_dim = pdims[-1]

    TB = _pick_tb(B, tb_max=tb_max)
    Bp = _round_up(B, TB)
    xp = _pad2(x, Bp, d_in)               # batch pad only; stays f32

    in_specs = [pl.BlockSpec((TB, d_in), lambda i: (i, 0))]
    for k in range(4):
        # Weights / biases: full-extent blocks, constant index_map -> stay
        # VMEM-resident across the whole grid.
        in_specs.append(pl.BlockSpec((pdims[k], pdims[k + 1]), lambda i: (0, 0)))
        in_specs.append(pl.BlockSpec((1, pdims[k + 1]), lambda i: (0, 0)))

    w_bytes = sum(int(a.size) * a.dtype.itemsize for a in prepared)
    flops = 2 * Bp * sum(pdims[k] * pdims[k + 1] for k in range(4))
    bytes_accessed = int(xp.size) * 4 + w_bytes + Bp * out_dim * 4
    cost = pl.CostEstimate(flops=flops, transcendentals=0,
                           bytes_accessed=bytes_accessed)

    out = pl.pallas_call(
        _mlp_kernel,
        out_shape=jax.ShapeDtypeStruct((Bp, out_dim), jnp.float32),
        grid=(Bp // TB,),
        in_specs=in_specs,
        out_specs=pl.BlockSpec((TB, out_dim), lambda i: (i, 0)),
        compiler_params=pltpu.CompilerParams(
            dimension_semantics=("parallel",)),
        cost_estimate=cost,
    )(xp, *prepared)

    return out[:B, :]


# --------------------------------------------------------------------------
# Synthetic parameters + pure-JAX reference (PyTorch eval-mode semantics)
# --------------------------------------------------------------------------
def init_params(key, input_dim, hidden_layers, output_dim):
    """Deterministic synthetic parameters matching the PyTorch module shapes.
    Linear weights stored pre-transposed as [d_in, d_out]; BatchNorm1d is
    represented by its inference-mode scale/shift."""
    dims = [input_dim] + list(hidden_layers) + [output_dim]
    params = {}
    eps = 1e-5
    keys = jax.random.split(key, 8)
    for i in range(4):
        d_in, d_out = dims[i], dims[i + 1]
        w = jax.random.normal(keys[2 * i], (d_in, d_out), jnp.float32) * 0.05
        b = jax.random.normal(keys[2 * i + 1], (1, d_out), jnp.float32) * 0.01
        params[f"w{i + 1}"] = w
        params[f"b{i + 1}"] = b
        if i < 3:
            gamma = jnp.ones((1, d_out), jnp.float32)
            beta = jnp.zeros((1, d_out), jnp.float32)
            running_mean = jnp.zeros((1, d_out), jnp.float32)
            running_var = jnp.ones((1, d_out), jnp.float32)
            scale = gamma / jnp.sqrt(running_var + eps)
            shift = beta - running_mean * scale
            params[f"s{i + 1}"] = scale
            params[f"t{i + 1}"] = shift
    return params


def reference_forward(x, params):
    h = x
    for i in range(1, 4):
        h = h @ params[f"w{i}"] + params[f"b{i}"]
        h = h * params[f"s{i}"] + params[f"t{i}"]
        h = jnp.maximum(h, 0.0)
    return h @ params["w4"] + params["b4"]


if __name__ == "__main__":
    key = jax.random.PRNGKey(0)
    k_x, k_p = jax.random.split(key)

    B = 8
    input_dim = 32
    hidden_layers = [64, 48, 32]
    output_dim = 10

    x = jax.random.normal(k_x, (B, input_dim), jnp.float32)
    params = init_params(k_p, input_dim, hidden_layers, output_dim)
    ref = reference_forward(x, params)

    # f32 MXU operands: tight check vs the f32 reference.
    prep_f32, pdims = prepare_params(params, mxu_dtype=jnp.float32)
    fwd_f32 = jax.jit(functools.partial(multiclass_classifier_v2, pdims=pdims))
    out_f32 = jax.block_until_ready(fwd_f32(x, prep_f32))
    assert out_f32.shape == (B, output_dim)
    assert jnp.allclose(out_f32, ref, atol=1e-4, rtol=1e-4), "f32 mismatch"

    # Default bf16 MXU operands (v5e/v6e/v7x throughput path); f32 accumulate,
    # f32 bias/ReLU, f32 logits out.
    prep_bf16, pdims = prepare_params(params, mxu_dtype=jnp.bfloat16)
    fwd_bf16 = jax.jit(functools.partial(multiclass_classifier_v2, pdims=pdims))
    out_bf16 = jax.block_until_ready(fwd_bf16(x, prep_bf16))
    assert out_bf16.shape == (B, output_dim)
    assert jnp.allclose(out_bf16, ref, atol=2e-2, rtol=2e-2), "bf16 mismatch"

    print("KERNEL_OK")
</pallas_src>

<mosaic_0001>
module attributes {stable_mosaic.version = 11 : i64} {
  func.func @_mlp_kernel(%arg0: i32, %arg1: memref<8x32xf32, #tpu.memory_space<vmem>>, %arg2: memref<32x128xf32, #tpu.memory_space<vmem>>, %arg3: memref<1x128xf32, #tpu.memory_space<vmem>>, %arg4: memref<128x128xf32, #tpu.memory_space<vmem>>, %arg5: memref<1x128xf32, #tpu.memory_space<vmem>>, %arg6: memref<128x128xf32, #tpu.memory_space<vmem>>, %arg7: memref<1x128xf32, #tpu.memory_space<vmem>>, %arg8: memref<128x10xf32, #tpu.memory_space<vmem>>, %arg9: memref<1x10xf32, #tpu.memory_space<vmem>>, %arg10: memref<8x10xf32, #tpu.memory_space<vmem>>) attributes {dimension_semantics = [#tpu.dimension_semantics<parallel>], iteration_bounds = array<i64: 1>, scalar_prefetch = 0 : i64, scratch_operands = 0 : i64, tpu.core_type = #tpu.core_type<tc>, window_params = [{transform_indices = @transform_0, window_bounds = array<i64: 8, 32>}, {pipeline_mode = #tpu.pipeline_mode<synchronous>, transform_indices = @transform_1, window_bounds = array<i64: 32, 128>}, {pipeline_mode = #tpu.pipeline_mode<synchronous>, transform_indices = @transform_2, window_bounds = array<i64: 1, 128>}, {pipeline_mode = #tpu.pipeline_mode<synchronous>, transform_indices = @transform_3, window_bounds = array<i64: 128, 128>}, {pipeline_mode = #tpu.pipeline_mode<synchronous>, transform_indices = @transform_4, window_bounds = array<i64: 1, 128>}, {pipeline_mode = #tpu.pipeline_mode<synchronous>, transform_indices = @transform_5, window_bounds = array<i64: 128, 128>}, {pipeline_mode = #tpu.pipeline_mode<synchronous>, transform_indices = @transform_6, window_bounds = array<i64: 1, 128>}, {pipeline_mode = #tpu.pipeline_mode<synchronous>, transform_indices = @transform_7, window_bounds = array<i64: 128, 10>}, {pipeline_mode = #tpu.pipeline_mode<synchronous>, transform_indices = @transform_8, window_bounds = array<i64: 1, 10>}, {transform_indices = @transform_9, window_bounds = array<i64: 8, 10>}]} {
    %c0 = arith.constant 0 : index
    %c0_0 = arith.constant 0 : index
    %0 = vector.load %arg1[%c0, %c0_0] : memref<8x32xf32, #tpu.memory_space<vmem>>, vector<8x32xf32>
    %c0_1 = arith.constant 0 : index
    %c0_2 = arith.constant 0 : index
    %1 = vector.load %arg2[%c0_1, %c0_2] : memref<32x128xf32, #tpu.memory_space<vmem>>, vector<32x128xf32>
    %cst = arith.constant dense<0.000000e+00> : vector<8x128xf32>
    %2 = tpu.matmul %0, %1, %cst {dimension_numbers = #tpu.dot_dimension_numbers<[1], [0], [0], [1], [0, 0, 1, 1], [], []>} : vector<8x32xf32>, vector<32x128xf32>, vector<8x128xf32> -> vector<8x128xf32>
    %c0_3 = arith.constant 0 : index
    %c0_4 = arith.constant 0 : index
    %3 = vector.load %arg3[%c0_3, %c0_4] : memref<1x128xf32, #tpu.memory_space<vmem>>, vector<1x128xf32>
    %4 = vector.broadcast %3 : vector<1x128xf32> to vector<8x128xf32>
    %5 = arith.addf %2, %4 : vector<8x128xf32>
    %cst_5 = arith.constant 0.000000e+00 : f32
    %6 = vector.broadcast %cst_5 : f32 to vector<8x128xf32>
    %7 = arith.maximumf %5, %6 : vector<8x128xf32>
    %c0_6 = arith.constant 0 : index
    %c0_7 = arith.constant 0 : index
    %8 = vector.load %arg4[%c0_6, %c0_7] : memref<128x128xf32, #tpu.memory_space<vmem>>, vector<128x128xf32>
    %cst_8 = arith.constant dense<0.000000e+00> : vector<8x128xf32>
    %9 = tpu.matmul %7, %8, %cst_8 {dimension_numbers = #tpu.dot_dimension_numbers<[1], [0], [0], [1], [0, 0, 1, 1], [], []>} : vector<8x128xf32>, vector<128x128xf32>, vector<8x128xf32> -> vector<8x128xf32>
    %c0_9 = arith.constant 0 : index
    %c0_10 = arith.constant 0 : index
    %10 = vector.load %arg5[%c0_9, %c0_10] : memref<1x128xf32, #tpu.memory_space<vmem>>, vector<1x128xf32>
    %11 = vector.broadcast %10 : vector<1x128xf32> to vector<8x128xf32>
    %12 = arith.addf %9, %11 : vector<8x128xf32>
    %cst_11 = arith.constant 0.000000e+00 : f32
    %13 = vector.broadcast %cst_11 : f32 to vector<8x128xf32>
    %14 = arith.maximumf %12, %13 : vector<8x128xf32>
    %c0_12 = arith.constant 0 : index
    %c0_13 = arith.constant 0 : index
    %15 = vector.load %arg6[%c0_12, %c0_13] : memref<128x128xf32, #tpu.memory_space<vmem>>, vector<128x128xf32>
    %cst_14 = arith.constant dense<0.000000e+00> : vector<8x128xf32>
    %16 = tpu.matmul %14, %15, %cst_14 {dimension_numbers = #tpu.dot_dimension_numbers<[1], [0], [0], [1], [0, 0, 1, 1], [], []>} : vector<8x128xf32>, vector<128x128xf32>, vector<8x128xf32> -> vector<8x128xf32>
    %c0_15 = arith.constant 0 : index
    %c0_16 = arith.constant 0 : index
    %17 = vector.load %arg7[%c0_15, %c0_16] : memref<1x128xf32, #tpu.memory_space<vmem>>, vector<1x128xf32>
    %18 = vector.broadcast %17 : vector<1x128xf32> to vector<8x128xf32>
    %19 = arith.addf %16, %18 : vector<8x128xf32>
    %cst_17 = arith.constant 0.000000e+00 : f32
    %20 = vector.broadcast %cst_17 : f32 to vector<8x128xf32>
    %21 = arith.maximumf %19, %20 : vector<8x128xf32>
    %c0_18 = arith.constant 0 : index
    %c0_19 = arith.constant 0 : index
    %22 = vector.load %arg8[%c0_18, %c0_19] : memref<128x10xf32, #tpu.memory_space<vmem>>, vector<128x10xf32>
    %cst_20 = arith.constant dense<0.000000e+00> : vector<8x10xf32>
    %23 = tpu.matmul %21, %22, %cst_20 {dimension_numbers = #tpu.dot_dimension_numbers<[1], [0], [0], [1], [0, 0, 1, 1], [], []>} : vector<8x128xf32>, vector<128x10xf32>, vector<8x10xf32> -> vector<8x10xf32>
    %c0_21 = arith.constant 0 : index
    %c0_22 = arith.constant 0 : index
    %24 = vector.load %arg9[%c0_21, %c0_22] : memref<1x10xf32, #tpu.memory_space<vmem>>, vector<1x10xf32>
    %25 = vector.broadcast %24 : vector<1x10xf32> to vector<8x10xf32>
    %26 = arith.addf %23, %25 : vector<8x10xf32>
    %c0_23 = arith.constant 0 : index
    %c0_24 = arith.constant 0 : index
    %27 = vector.load %arg10[%c0_23, %c0_24] : memref<8x10xf32, #tpu.memory_space<vmem>>, vector<8x10xf32>
    tpu.vector_store %arg10[%c0_23, %c0_24], %26 {strides = array<i32>} : memref<8x10xf32, #tpu.memory_space<vmem>>, vector<8x10xf32>,
    return
  }
  func.func @transform_0(%arg0: i32) -> (i32, i32) {
    %c0_i32 = arith.constant 0 : i32
    %c0_i32_0 = arith.constant 0 : i32
    return %arg0, %c0_i32 : i32, i32
  }
  func.func @transform_1(%arg0: i32) -> (i32, i32) {
    %c0_i32 = arith.constant 0 : i32
    %c0_i32_0 = arith.constant 0 : i32
    %c0_i32_1 = arith.constant 0 : i32
    return %c0_i32, %c0_i32_0 : i32, i32
  }
  func.func @transform_2(%arg0: i32) -> (i32, i32) {
    %c0_i32 = arith.constant 0 : i32
    %c0_i32_0 = arith.constant 0 : i32
    %c0_i32_1 = arith.constant 0 : i32
    return %c0_i32, %c0_i32_0 : i32, i32
  }
  func.func @transform_3(%arg0: i32) -> (i32, i32) {
    %c0_i32 = arith.constant 0 : i32
    %c0_i32_0 = arith.constant 0 : i32
    %c0_i32_1 = arith.constant 0 : i32
    return %c0_i32, %c0_i32_0 : i32, i32
  }
  func.func @transform_4(%arg0: i32) -> (i32, i32) {
    %c0_i32 = arith.constant 0 : i32
    %c0_i32_0 = arith.constant 0 : i32
    %c0_i32_1 = arith.constant 0 : i32
    return %c0_i32, %c0_i32_0 : i32, i32
  }
  func.func @transform_5(%arg0: i32) -> (i32, i32) {
    %c0_i32 = arith.constant 0 : i32
    %c0_i32_0 = arith.constant 0 : i32
    %c0_i32_1 = arith.constant 0 : i32
    return %c0_i32, %c0_i32_0 : i32, i32
  }
  func.func @transform_6(%arg0: i32) -> (i32, i32) {
    %c0_i32 = arith.constant 0 : i32
    %c0_i32_0 = arith.constant 0 : i32
    %c0_i32_1 = arith.constant 0 : i32
    return %c0_i32, %c0_i32_0 : i32, i32
  }
  func.func @transform_7(%arg0: i32) -> (i32, i32) {
    %c0_i32 = arith.constant 0 : i32
    %c0_i32_0 = arith.constant 0 : i32
    %c0_i32_1 = arith.constant 0 : i32
    return %c0_i32, %c0_i32_0 : i32, i32
  }
  func.func @transform_8(%arg0: i32) -> (i32, i32) {
    %c0_i32 = arith.constant 0 : i32
    %c0_i32_0 = arith.constant 0 : i32
    %c0_i32_1 = arith.constant 0 : i32
    return %c0_i32, %c0_i32_0 : i32, i32
  }
  func.func @transform_9(%arg0: i32) -> (i32, i32) {
    %c0_i32 = arith.constant 0 : i32
    %c0_i32_0 = arith.constant 0 : i32
    return %arg0, %c0_i32 : i32, i32
  }
}

</mosaic_0001>

<llo_original>
// kernel: multiclass_classifier_v2.1
$region0: #{multiclass_classifier_v2.1}
  #allocation0 [shape = 'u32[]', space=smem, size = 0x4, offset = 0x4, fixed_abs, tag = 'smem constant byte address 0x4 - core index']
  #allocation1 [shape = 'u32[144,128]{1,0:T(1,128)}', space=vmem, size = 0x12000, scoped, tag = 'internal scratch']
  %s0 = inlined_call_operand.vmem [shape: f32[8,32], index: 0, kind: input, shape index: {}]
  %s1 = inlined_call_operand.hbm [shape: f32[32,128], index: 1, kind: input, shape index: {}]
  %s2 = inlined_call_operand.vmem [shape: f32[1,128], index: 2, kind: input, shape index: {}]
  %s3 = inlined_call_operand.vmem [shape: f32[128,128], index: 3, kind: input, shape index: {}]
  %s4 = inlined_call_operand.vmem [shape: f32[1,128], index: 4, kind: input, shape index: {}]
  %s5 = inlined_call_operand.hbm [shape: f32[128,128], index: 5, kind: input, shape index: {}]
  %s6 = inlined_call_operand.vmem [shape: f32[1,128], index: 6, kind: input, shape index: {}]
  %s7 = inlined_call_operand.vmem [shape: f32[128,10], index: 7, kind: input, shape index: {}]
  %s8 = inlined_call_operand.vmem [shape: f32[1,10], index: 8, kind: input, shape index: {}]
  %s9 = inlined_call_operand.hbm [shape: f32[8,10], index: 9, kind: output, shape index: {}]
  %s10 = sld [smem:[#allocation0]]
  $region54: #{multiclass_classifier_v2.1} parent=0
    _
  %s12 = ssub.s32 1, %s10
  %s13 = scalar_select 0, %s12, %s10
  $region1: #{multiclass_classifier_v2.1} parent=0
    #allocation2 [shape = 'u8[16384]{0}', space=vmem, size = 0x4000, scoped, tag = 'input window, operand 1, single buffered']
    #allocation3 [shape = 's32[1]{0}', space=sflag, size = 0x4, scoped, tag = 'scoped memory for multiclass_classifier_v2.1']
    #allocation4 [shape = 's32[1]{0}', space=sflag, size = 0x4, scoped, tag = 'scoped memory for multiclass_classifier_v2.1']
    #allocation5 [shape = 'u8[65536]{0}', space=vmem, size = 0x10000, scoped, tag = 'input window, operand 5, single buffered']
    #allocation6 [shape = 's32[1]{0}', space=sflag, size = 0x4, scoped, tag = 'scoped memory for multiclass_classifier_v2.1']
    #allocation7 [shape = 'u8[4096]{0}', space=vmem, size = 0x1000, scoped, tag = 'output window, operand 0, single buffered']
    %14 = vsyncpa [#allocation3], 0
    %15 = vsyncpa [#allocation6], 0
    %16 = vsyncpa [#allocation4], 0
    // Predicated region
    $region2: #{multiclass_classifier_v2.1} parent=1 // pred_check
      _
    $region3: #{multiclass_classifier_v2.1} parent=1 // pred_check_branch
      %18 = sbr.rel (0) target = $region5
    $region4: #{multiclass_classifier_v2.1} parent=1 // pred_region
      _
    $region5: #{multiclass_classifier_v2.1} parent=1 // pred_fallthru
      _
    // Predicated region
    $region6: #{multiclass_classifier_v2.1} parent=1 // pred_check
      _
    $region7: #{multiclass_classifier_v2.1} parent=1 // pred_check_branch
      %20 = sbr.rel (0) target = $region9
    $region8: #{multiclass_classifier_v2.1} parent=1 // pred_region
      %s22 = ssub.s32 512, 512
      %23 = vsyncadd [#allocation3], %s22
      %s24 = sshll.u32 [#allocation2], 4
      %s25 = int_to_ptr.vmem [resolvable:$true] %s24
      %30 = dma.hbm_to_vmem [thread:$0]  %s1, 512, %s25, [#allocation3], 128, 128, 8
    $region9: #{multiclass_classifier_v2.1} parent=1 // pred_fallthru
      _
    // Predicated region
    $region10: #{multiclass_classifier_v2.1} parent=1 // pred_check
      _
    $region11: #{multiclass_classifier_v2.1} parent=1 // pred_check_branch
      %32 = sbr.rel (0) target = $region13
    $region12: #{multiclass_classifier_v2.1} parent=1 // pred_region
      _
    $region13: #{multiclass_classifier_v2.1} parent=1 // pred_fallthru
      _
    // Predicated region
    $region14: #{multiclass_classifier_v2.1} parent=1 // pred_check
      _
    $region15: #{multiclass_classifier_v2.1} parent=1 // pred_check_branch
      %34 = sbr.rel (0) target = $region17
    $region16: #{multiclass_classifier_v2.1} parent=1 // pred_region
      _
    $region17: #{multiclass_classifier_v2.1} parent=1 // pred_fallthru
      _
    // Predicated region
    $region18: #{multiclass_classifier_v2.1} parent=1 // pred_check
      _
    $region19: #{multiclass_classifier_v2.1} parent=1 // pred_check_branch
      %36 = sbr.rel (0) target = $region21
    $region20: #{multiclass_classifier_v2.1} parent=1 // pred_region
      _
    $region21: #{multiclass_classifier_v2.1} parent=1 // pred_fallthru
      _
    // Predicated region
    $region22: #{multiclass_classifier_v2.1} parent=1 // pred_check
      _
    $region23: #{multiclass_classifier_v2.1} parent=1 // pred_check_branch
      %38 = sbr.rel (0) target = $region25
    $region24: #{multiclass_classifier_v2.1} parent=1 // pred_region
      %s40 = ssub.s32 2048, 2048
      %41 = vsyncadd [#allocation6], %s40
      %s42 = sshll.u32 [#allocation5], 4
      %s43 = int_to_ptr.vmem [resolvable:$true] %s42
      %48 = dma.hbm_to_vmem [thread:$0]  %s5, 2048, %s43, [#allocation6], 128, 128, 8
    $region25: #{multiclass_classifier_v2.1} parent=1 // pred_fallthru
      _
    // Predicated region
    $region26: #{multiclass_classifier_v2.1} parent=1 // pred_check
      _
    $region27: #{multiclass_classifier_v2.1} parent=1 // pred_check_branch
      %50 = sbr.rel (0) target = $region29
    $region28: #{multiclass_classifier_v2.1} parent=1 // pred_region
      _
    $region29: #{multiclass_classifier_v2.1} parent=1 // pred_fallthru
      _
    // Predicated region
    $region30: #{multiclass_classifier_v2.1} parent=1 // pred_check
      _
    $region31: #{multiclass_classifier_v2.1} parent=1 // pred_check_branch
      %52 = sbr.rel (0) target = $region33
    $region32: #{multiclass_classifier_v2.1} parent=1 // pred_region
      _
    $region33: #{multiclass_classifier_v2.1} parent=1 // pred_fallthru
      _
    // Predicated region
    $region34: #{multiclass_classifier_v2.1} parent=1 // pred_check
      _
    $region35: #{multiclass_classifier_v2.1} parent=1 // pred_check_branch
      %54 = sbr.rel (0) target = $region37
    $region36: #{multiclass_classifier_v2.1} parent=1 // pred_region
      _
    $region37: #{multiclass_classifier_v2.1} parent=1 // pred_fallthru
      _
    // Predicated region
    $region38: #{multiclass_classifier_v2.1} parent=1 // pred_check
      _
    $region39: #{multiclass_classifier_v2.1} parent=1 // pred_check_branch
      %56 = sbr.rel (0) target = $region41
    $region40: #{multiclass_classifier_v2.1} parent=1 // pred_region
      %57 = dma.done [#allocation3], 512
    $region41: #{multiclass_classifier_v2.1} parent=1 // pred_fallthru
      _
    // Predicated region
    $region42: #{multiclass_classifier_v2.1} parent=1 // pred_check
      _
    $region43: #{multiclass_classifier_v2.1} parent=1 // pred_check_branch
      %59 = sbr.rel (0) target = $region45
    $region44: #{multiclass_classifier_v2.1} parent=1 // pred_region
      %60 = dma.done [#allocation6], 2048
    $region45: #{multiclass_classifier_v2.1} parent=1 // pred_fallthru
      _
    %v61 = vld [vmem:[%s0] sm:$0xff]
    %v62 = vld [vmem:[#allocation2] sm:$0xff]
    %v63 = vld [vmem:[#allocation2 + $0x8] sm:$0xff]
    %v64 = vld [vmem:[#allocation2 + $0x10] sm:$0xff]
    %v65 = vld [vmem:[#allocation2 + $0x18] sm:$0xff]
    %v66 = vld [vmem:[%s2] sm:$0x1]
    %v68 = vlaneseq
    %v69 = vshrl.u32 %v68, 7
    %v70 = vsub.s32 0, %v69
    %v71 = vrot.slane %v66, %v70
    %vm73 = vcmask 261120
    %v75 = vsel %vm73, %v61, 0
    %77 = vmatprep.subr.mxu0 0.0
    %78 = vmatpush1.msra.mxu0 0.0
    %79 = vmatprep.subr.mxu0 0.0
    %80 = vmatpush1.msra.mxu0 0.0
    %81 = vmatprep.subr.mxu0 0.0
    %82 = vmatpush1.msra.mxu0 0.0
    %83 = vmatprep.subr.mxu0 0.0
    %84 = vmatpush1.msra.mxu0 0.0
    %85 = vmatprep.subr.mxu0 0.0
    %86 = vmatpush1.msra.mxu0 0.0
    %87 = vmatprep.subr.mxu0 0.0
    %88 = vmatpush1.msra.mxu0 0.0
    %89 = vmatprep.subr.mxu0 0.0
    %90 = vmatpush1.msra.mxu0 0.0
    %91 = vmatprep.subr.mxu0 0.0
    %92 = vmatpush1.msra.mxu0 0.0
    %93 = vmatprep.subr.mxu0 0.0
    %94 = vmatpush1.msra.mxu0 0.0
    %95 = vmatprep.subr.mxu0 0.0
    %96 = vmatpush1.msra.mxu0 0.0
    %97 = vmatprep.subr.mxu0 0.0
    %98 = vmatpush1.msra.mxu0 0.0
    %99 = vmatprep.subr.mxu0 0.0
    %100 = vmatpush1.msra.mxu0 0.0
    %101 = vmatprep.subr.mxu0 0.0
    %102 = vmatpush1.msra.mxu0 %v65
    %103 = vmatprep.subr.mxu0 0.0
    %104 = vmatpush1.msra.mxu0 %v64
    %105 = vmatprep.subr.mxu0 0.0
    %106 = vmatpush1.msra.mxu0 %v63
    %107 = vmatprep.subr.mxu0 0.0
    %108 = vmatpush1.msra.mxu0 %v62
    %109 = vmatprep.subr.mxu0 0.0
    %110 = vmatpush2.msra.mxu0 0.0
    %111 = vmatprep.subr.mxu0 0.0
    %112 = vmatpush2.msra.mxu0 0.0
    %113 = vmatprep.subr.mxu0 0.0
    %114 = vmatpush2.msra.mxu0 0.0
    %115 = vmatprep.subr.mxu0 0.0
    %116 = vmatpush2.msra.mxu0 0.0
    %117 = vmatprep.subr.mxu0 0.0
    %118 = vmatpush2.msra.mxu0 0.0
    %119 = vmatprep.subr.mxu0 0.0
    %120 = vmatpush2.msra.mxu0 0.0
    %121 = vmatprep.subr.mxu0 0.0
    %122 = vmatpush2.msra.mxu0 0.0
    %123 = vmatprep.subr.mxu0 0.0
    %124 = vmatpush2.msra.mxu0 0.0
    %125 = vmatprep.subr.mxu0 0.0
    %126 = vmatpush2.msra.mxu0 0.0
    %127 = vmatprep.subr.mxu0 0.0
    %128 = vmatpush2.msra.mxu0 0.0
    %129 = vmatprep.subr.mxu0 0.0
    %130 = vmatpush2.msra.mxu0 0.0
    %131 = vmatprep.subr.mxu0 0.0
    %132 = vmatpush2.msra.mxu0 0.0
    %133 = vmatprep.subr.mxu0 0.0
    %134 = vmatpush2.msra.mxu0 0.0
    %135 = vmatprep.subr.mxu0 0.0
    %136 = vmatpush2.msra.mxu0 0.0
    %137 = vmatprep.subr.mxu0 0.0
    %138 = vmatpush2.msra.mxu0 0.0
    %139 = vmatprep.subr.mxu0 0.0
    %140 = vmatpush2.msra.mxu0 0.0
    %141 = vmatprep.mubr.f32.mxu0 0.0
    %142 = vmatmul.mubr.f32.gmra.mxu0 %v75
    %v143 = vpop.f32.mrf.mxu0
    %v144 = vadd.f32 %v71, %v143
    %v145 = vpop.f32.mrf.mxu0
    %146 = vdwg.mxu0
    %v147 = vmax.f32 %v144, 0.0
    %v148 = vld [vmem:[%s3] sm:$0xff]
    %v149 = vld [vmem:[%s3 + $0x8] sm:$0xff]
    %v150 = vld [vmem:[%s3 + $0x10] sm:$0xff]
    %v151 = vld [vmem:[%s3 + $0x18] sm:$0xff]
    %v152 = vld [vmem:[%s3 + $0x20] sm:$0xff]
    %v153 = vld [vmem:[%s3 + $0x28] sm:$0xff]
    %v154 = vld [vmem:[%s3 + $0x30] sm:$0xff]
    %v155 = vld [vmem:[%s3 + $0x38] sm:$0xff]
    %v156 = vld [vmem:[%s3 + $0x40] sm:$0xff]
    %v157 = vld [vmem:[%s3 + $0x48] sm:$0xff]
    %v158 = vld [vmem:[%s3 + $0x50] sm:$0xff]
    %v159 = vld [vmem:[%s3 + $0x58] sm:$0xff]
    %v160 = vld [vmem:[%s3 + $0x60] sm:$0xff]
    %v161 = vld [vmem:[%s3 + $0x68] sm:$0xff]
    %v162 = vld [vmem:[%s3 + $0x70] sm:$0xff]
    %v163 = vld [vmem:[%s3 + $0x78] sm:$0xff]
    %v164 = vld [vmem:[%s4] sm:$0x1]
    %v166 = vlaneseq
    %v167 = vshrl.u32 %v166, 7
    %v168 = vsub.s32 0, %v167
    %v169 = vrot.slane %v164, %v168
    %171 = vmatprep.subr.mxu0 0.0
    %172 = vmatpush1.msra.mxu0 %v163
    %173 = vmatprep.subr.mxu0 0.0
    %174 = vmatpush1.msra.mxu0 %v162
    %175 = vmatprep.subr.mxu0 0.0
    %176 = vmatpush1.msra.mxu0 %v161
    %177 = vmatprep.subr.mxu0 0.0
    %178 = vmatpush1.msra.mxu0 %v160
    %179 = vmatprep.subr.mxu0 0.0
    %180 = vmatpush1.msra.mxu0 %v159
    %181 = vmatprep.subr.mxu0 0.0
    %182 = vmatpush1.msra.mxu0 %v158
    %183 = vmatprep.subr.mxu0 0.0
    %184 = vmatpush1.msra.mxu0 %v157
    %185 = vmatprep.subr.mxu0 0.0
    %186 = vmatpush1.msra.mxu0 %v156
    %187 = vmatprep.subr.mxu0 0.0
    %188 = vmatpush1.msra.mxu0 %v155
    %189 = vmatprep.subr.mxu0 0.0
    %190 = vmatpush1.msra.mxu0 %v154
    %191 = vmatprep.subr.mxu0 0.0
    %192 = vmatpush1.msra.mxu0 %v153
    %193 = vmatprep.subr.mxu0 0.0
    %194 = vmatpush1.msra.mxu0 %v152
    %195 = vmatprep.subr.mxu0 0.0
    %196 = vmatpush1.msra.mxu0 %v151
    %197 = vmatprep.subr.mxu0 0.0
    %198 = vmatpush1.msra.mxu0 %v150
    %199 = vmatprep.subr.mxu0 0.0
    %200 = vmatpush1.msra.mxu0 %v149
    %201 = vmatprep.subr.mxu0 0.0
    %202 = vmatpush1.msra.mxu0 %v148
    %203 = vmatprep.subr.mxu0 0.0
    %204 = vmatpush2.msra.mxu0 0.0
    %205 = vmatprep.subr.mxu0 0.0
    %206 = vmatpush2.msra.mxu0 0.0
    %207 = vmatprep.subr.mxu0 0.0
    %208 = vmatpush2.msra.mxu0 0.0
    %209 = vmatprep.subr.mxu0 0.0
    %210 = vmatpush2.msra.mxu0 0.0
    %211 = vmatprep.subr.mxu0 0.0
    %212 = vmatpush2.msra.mxu0 0.0
    %213 = vmatprep.subr.mxu0 0.0
    %214 = vmatpush2.msra.mxu0 0.0
    %215 = vmatprep.subr.mxu0 0.0
    %216 = vmatpush2.msra.mxu0 0.0
    %217 = vmatprep.subr.mxu0 0.0
    %218 = vmatpush2.msra.mxu0 0.0
    %219 = vmatprep.subr.mxu0 0.0
    %220 = vmatpush2.msra.mxu0 0.0
    %221 = vmatprep.subr.mxu0 0.0
    %222 = vmatpush2.msra.mxu0 0.0
    %223 = vmatprep.subr.mxu0 0.0
    %224 = vmatpush2.msra.mxu0 0.0
    %225 = vmatprep.subr.mxu0 0.0
    %226 = vmatpush2.msra.mxu0 0.0
    %227 = vmatprep.subr.mxu0 0.0
    %228 = vmatpush2.msra.mxu0 0.0
    %229 = vmatprep.subr.mxu0 0.0
    %230 = vmatpush2.msra.mxu0 0.0
    %231 = vmatprep.subr.mxu0 0.0
    %232 = vmatpush2.msra.mxu0 0.0
    %233 = vmatprep.subr.mxu0 0.0
    %234 = vmatpush2.msra.mxu0 0.0
    %235 = vmatprep.mubr.f32.mxu0 0.0
    %236 = vmatmul.mubr.f32.gmra.mxu0 %v147
    %v237 = vpop.f32.mrf.mxu0
    %v238 = vadd.f32 %v169, %v237
    %v239 = vpop.f32.mrf.mxu0
    %240 = vdwg.mxu0
    %v241 = vmax.f32 %v238, 0.0
    %v242 = vld [vmem:[#allocation5] sm:$0xff]
    %v243 = vld [vmem:[#allocation5 + $0x8] sm:$0xff]
    %v244 = vld [vmem:[#allocation5 + $0x10] sm:$0xff]
    %v245 = vld [vmem:[#allocation5 + $0x18] sm:$0xff]
    %v246 = vld [vmem:[#allocation5 + $0x20] sm:$0xff]
    %v247 = vld [vmem:[#allocation5 + $0x28] sm:$0xff]
    %v248 = vld [vmem:[#allocation5 + $0x30] sm:$0xff]
    %v249 = vld [vmem:[#allocation5 + $0x38] sm:$0xff]
    %v250 = vld [vmem:[#allocation5 + $0x40] sm:$0xff]
    %v251 = vld [vmem:[#allocation5 + $0x48] sm:$0xff]
    %v252 = vld [vmem:[#allocation5 + $0x50] sm:$0xff]
    %v253 = vld [vmem:[#allocation5 + $0x58] sm:$0xff]
    %v254 = vld [vmem:[#allocation5 + $0x60] sm:$0xff]
    %v255 = vld [vmem:[#allocation5 + $0x68] sm:$0xff]
    %v256 = vld [vmem:[#allocation5 + $0x70] sm:$0xff]
    %v257 = vld [vmem:[#allocation5 + $0x78] sm:$0xff]
    %v258 = vld [vmem:[%s6] sm:$0x1]
    %v260 = vlaneseq
    %v261 = vshrl.u32 %v260, 7
    %v262 = vsub.s32 0, %v261
    %v263 = vrot.slane %v258, %v262
    %265 = vmatprep.subr.mxu0 0.0
    %266 = vmatpush1.msra.mxu0 %v257
    %267 = vmatprep.subr.mxu0 0.0
    %268 = vmatpush1.msra.mxu0 %v256
    %269 = vmatprep.subr.mxu0 0.0
    %270 = vmatpush1.msra.mxu0 %v255
    %271 = vmatprep.subr.mxu0 0.0
    %272 = vmatpush1.msra.mxu0 %v254
    %273 = vmatprep.subr.mxu0 0.0
    %274 = vmatpush1.msra.mxu0 %v253
    %275 = vmatprep.subr.mxu0 0.0
    %276 = vmatpush1.msra.mxu0 %v252
    %277 = vmatprep.subr.mxu0 0.0
    %278 = vmatpush1.msra.mxu0 %v251
    %279 = vmatprep.subr.mxu0 0.0
    %280 = vmatpush1.msra.mxu0 %v250
    %281 = vmatprep.subr.mxu0 0.0
    %282 = vmatpush1.msra.mxu0 %v249
    %283 = vmatprep.subr.mxu0 0.0
    %284 = vmatpush1.msra.mxu0 %v248
    %285 = vmatprep.subr.mxu0 0.0
    %286 = vmatpush1.msra.mxu0 %v247
    %287 = vmatprep.subr.mxu0 0.0
    %288 = vmatpush1.msra.mxu0 %v246
    %289 = vmatprep.subr.mxu0 0.0
    %290 = vmatpush1.msra.mxu0 %v245
    %291 = vmatprep.subr.mxu0 0.0
    %292 = vmatpush1.msra.mxu0 %v244
    %293 = vmatprep.subr.mxu0 0.0
    %294 = vmatpush1.msra.mxu0 %v243
    %295 = vmatprep.subr.mxu0 0.0
    %296 = vmatpush1.msra.mxu0 %v242
    %297 = vmatprep.subr.mxu0 0.0
    %298 = vmatpush2.msra.mxu0 0.0
    %299 = vmatprep.subr.mxu0 0.0
    %300 = vmatpush2.msra.mxu0 0.0
    %301 = vmatprep.subr.mxu0 0.0
    %302 = vmatpush2.msra.mxu0 0.0
    %303 = vmatprep.subr.mxu0 0.0
    %304 = vmatpush2.msra.mxu0 0.0
    %305 = vmatprep.subr.mxu0 0.0
    %306 = vmatpush2.msra.mxu0 0.0
    %307 = vmatprep.subr.mxu0 0.0
    %308 = vmatpush2.msra.mxu0 0.0
    %309 = vmatprep.subr.mxu0 0.0
    %310 = vmatpush2.msra.mxu0 0.0
    %311 = vmatprep.subr.mxu0 0.0
    %312 = vmatpush2.msra.mxu0 0.0
    %313 = vmatprep.subr.mxu0 0.0
    %314 = vmatpush2.msra.mxu0 0.0
    %315 = vmatprep.subr.mxu0 0.0
    %316 = vmatpush2.msra.mxu0 0.0
    %317 = vmatprep.subr.mxu0 0.0
    %318 = vmatpush2.msra.mxu0 0.0
    %319 = vmatprep.subr.mxu0 0.0
    %320 = vmatpush2.msra.mxu0 0.0
    %321 = vmatprep.subr.mxu0 0.0
    %322 = vmatpush2.msra.mxu0 0.0
    %323 = vmatprep.subr.mxu0 0.0
    %324 = vmatpush2.msra.mxu0 0.0
    %325 = vmatprep.subr.mxu0 0.0
    %326 = vmatpush2.msra.mxu0 0.0
    %327 = vmatprep.subr.mxu0 0.0
    %328 = vmatpush2.msra.mxu0 0.0
    %329 = vmatprep.mubr.f32.mxu0 0.0
    %330 = vmatmul.mubr.f32.gmra.mxu0 %v241
    %v331 = vpop.f32.mrf.mxu0
    %v332 = vadd.f32 %v263, %v331
    %v333 = vpop.f32.mrf.mxu0
    %334 = vdwg.mxu0
    %v335 = vmax.f32 %v332, 0.0
    %v336 = vld [vmem:[%s7] sm:$0xff]
    %v337 = vld [vmem:[%s7 + $0x8] sm:$0xff]
    %v338 = vld [vmem:[%s7 + $0x10] sm:$0xff]
    %v339 = vld [vmem:[%s7 + $0x18] sm:$0xff]
    %v340 = vld [vmem:[%s7 + $0x20] sm:$0xff]
    %v341 = vld [vmem:[%s7 + $0x28] sm:$0xff]
    %v342 = vld [vmem:[%s7 + $0x30] sm:$0xff]
    %v343 = vld [vmem:[%s7 + $0x38] sm:$0xff]
    %v344 = vld [vmem:[%s7 + $0x40] sm:$0xff]
    %v345 = vld [vmem:[%s7 + $0x48] sm:$0xff]
    %v346 = vld [vmem:[%s7 + $0x50] sm:$0xff]
    %v347 = vld [vmem:[%s7 + $0x58] sm:$0xff]
    %v348 = vld [vmem:[%s7 + $0x60] sm:$0xff]
    %v349 = vld [vmem:[%s7 + $0x68] sm:$0xff]
    %v350 = vld [vmem:[%s7 + $0x70] sm:$0xff]
    %v351 = vld [vmem:[%s7 + $0x78] sm:$0xff]
    %v352 = vld [vmem:[%s8] sm:$0x1]
    %v354 = vlaneseq
    %v355 = vshrl.u32 %v354, 7
    %v356 = vsub.s32 0, %v355
    %v357 = vrot.slane %v352, %v356
    %359 = vmatprep.subr.mxu0 0.0
    %360 = vmatpush1.msra.mxu0 %v351
    %361 = vmatprep.subr.mxu0 0.0
    %362 = vmatpush1.msra.mxu0 %v350
    %363 = vmatprep.subr.mxu0 0.0
    %364 = vmatpush1.msra.mxu0 %v349
    %365 = vmatprep.subr.mxu0 0.0
    %366 = vmatpush1.msra.mxu0 %v348
    %367 = vmatprep.subr.mxu0 0.0
    %368 = vmatpush1.msra.mxu0 %v347
    %369 = vmatprep.subr.mxu0 0.0
    %370 = vmatpush1.msra.mxu0 %v346
    %371 = vmatprep.subr.mxu0 0.0
    %372 = vmatpush1.msra.mxu0 %v345
    %373 = vmatprep.subr.mxu0 0.0
    %374 = vmatpush1.msra.mxu0 %v344
    %375 = vmatprep.subr.mxu0 0.0
    %376 = vmatpush1.msra.mxu0 %v343
    %377 = vmatprep.subr.mxu0 0.0
    %378 = vmatpush1.msra.mxu0 %v342
    %379 = vmatprep.subr.mxu0 0.0
    %380 = vmatpush1.msra.mxu0 %v341
    %381 = vmatprep.subr.mxu0 0.0
    %382 = vmatpush1.msra.mxu0 %v340
    %383 = vmatprep.subr.mxu0 0.0
    %384 = vmatpush1.msra.mxu0 %v339
    %385 = vmatprep.subr.mxu0 0.0
    %386 = vmatpush1.msra.mxu0 %v338
    %387 = vmatprep.subr.mxu0 0.0
    %388 = vmatpush1.msra.mxu0 %v337
    %389 = vmatprep.subr.mxu0 0.0
    %390 = vmatpush1.msra.mxu0 %v336
    %391 = vmatprep.subr.mxu0 0.0
    %392 = vmatpush2.msra.mxu0 0.0
    %393 = vmatprep.subr.mxu0 0.0
    %394 = vmatpush2.msra.mxu0 0.0
    %395 = vmatprep.subr.mxu0 0.0
    %396 = vmatpush2.msra.mxu0 0.0
    %397 = vmatprep.subr.mxu0 0.0
    %398 = vmatpush2.msra.mxu0 0.0
    %399 = vmatprep.subr.mxu0 0.0
    %400 = vmatpush2.msra.mxu0 0.0
    %401 = vmatprep.subr.mxu0 0.0
    %402 = vmatpush2.msra.mxu0 0.0
    %403 = vmatprep.subr.mxu0 0.0
    %404 = vmatpush2.msra.mxu0 0.0
    %405 = vmatprep.subr.mxu0 0.0
    %406 = vmatpush2.msra.mxu0 0.0
    %407 = vmatprep.subr.mxu0 0.0
    %408 = vmatpush2.msra.mxu0 0.0
    %409 = vmatprep.subr.mxu0 0.0
    %410 = vmatpush2.msra.mxu0 0.0
    %411 = vmatprep.subr.mxu0 0.0
    %412 = vmatpush2.msra.mxu0 0.0
    %413 = vmatprep.subr.mxu0 0.0
    %414 = vmatpush2.msra.mxu0 0.0
    %415 = vmatprep.subr.mxu0 0.0
    %416 = vmatpush2.msra.mxu0 0.0
    %417 = vmatprep.subr.mxu0 0.0
    %418 = vmatpush2.msra.mxu0 0.0
    %419 = vmatprep.subr.mxu0 0.0
    %420 = vmatpush2.msra.mxu0 0.0
    %421 = vmatprep.subr.mxu0 0.0
    %422 = vmatpush2.msra.mxu0 0.0
    %423 = vmatprep.mubr.f32.mxu0 0.0
    %424 = vmatmul.mubr.f32.gmra.mxu0 %v335
    %v425 = vpop.f32.mrf.mxu0
    %v426 = vadd.f32 %v357, %v425
    %v427 = vpop.f32.mrf.mxu0
    %428 = vdwg.mxu0
    %vm429 = vcmask 80896
    %430 = vst.msk [vmem:[#allocation7] sm:$0xff] %vm429, %v426
    // Predicated region
    $region46: #{multiclass_classifier_v2.1} parent=1 // pred_check
      _
    $region47: #{multiclass_classifier_v2.1} parent=1 // pred_check_branch
      %432 = sbr.rel (0) target = $region49
    $region48: #{multiclass_classifier_v2.1} parent=1 // pred_region
      %s434 = ssub.s32 128, 128
      %435 = vsyncadd [#allocation4], %s434
      %s437 = sshll.u32 [#allocation7], 4
      %s438 = int_to_ptr.vmem [resolvable:$true] %s437
      %440 = dma.vmem_to_hbm [thread:$0]  %s438, 128, %s9, [#allocation4]
    $region49: #{multiclass_classifier_v2.1} parent=1 // pred_fallthru
      _
    // Predicated region
    $region50: #{multiclass_classifier_v2.1} parent=1 // pred_check
      _
    $region51: #{multiclass_classifier_v2.1} parent=1 // pred_check_branch
      %442 = sbr.rel (0) target = $region53
    $region52: #{multiclass_classifier_v2.1} parent=1 // pred_region
      %443 = dma.done [#allocation4], 128
    $region53: #{multiclass_classifier_v2.1} parent=1 // pred_fallthru
      _
    %444 = vsyncpa [#allocation3], 1
    %445 = vsyncpa [#allocation6], 1
    %446 = vsyncpa [#allocation4], 1

</llo_original>
